<compile_context>
chip_gen: v6e
topology: v6e:2x2x1
jax: 0.10.0
libtpu: 0.0.40
codegen_flags: <defaults>
</compile_context>

<pallas_src>
import jax
import jax.numpy as jnp
from jax.experimental import pallas as pl
from jax.experimental.pallas import tpu as pltpu


def _round_up(n, m):
    return ((n + m - 1) // m) * m


def _largest_divisor(n, cap):
    cap = max(1, min(n, cap))
    for k in range(cap, 0, -1):
        if n % k == 0:
            return k
    return 1


def _pick_vocab_tile(vp):
    for vt in (1024, 512, 256, 128):
        if vp % vt == 0:
            return vt
    return vp


# ---------------------------------------------------------------------------
# Stage 1: embedding gather + batched x @ W_ih + bias  (parallel over rows)
# ---------------------------------------------------------------------------
def _embed_gates_kernel(tok_ref,                  # SMEM [T*BP] int32 (prefetch)
                        emb_ref,                  # [VP, EP] f32 (resident)
                        wih_ref,                  # [EP, 4HP] bf16 (resident)
                        b_ref,                    # [1, 4HP] f32 (resident)
                        gx_ref,                   # out block [R, 4HP] f32
                        emb_buf):                 # VMEM scratch [R, EP] f32
    R = emb_buf.shape[0]
    r0 = pl.program_id(0) * R
    # Direct row gather from the resident table (no one-hot / MXU gather).
    for r in range(R):
        tok = tok_ref[r0 + r]
        emb_buf[r:r + 1, :] = emb_ref[pl.ds(tok, 1), :]
    wdt = wih_ref.dtype
    gx_ref[...] = (jnp.dot(emb_buf[...].astype(wdt), wih_ref[...],
                           preferred_element_type=jnp.float32)
                   + b_ref[...])


# ---------------------------------------------------------------------------
# Stage 2: LSTM recurrence (sequential; K steps per grid iteration)
# ---------------------------------------------------------------------------
def _lstm_kernel(gx_ref,                          # [K*BP, 4HP] f32 (block t)
                 h0_ref, c0_ref,                  # [BP, HP] f32 (resident)
                 whh_ref,                         # [HP, 4HP] bf16 (resident)
                 hseq_ref,                        # out block [K*BP, HP] f32
                 h_ref, c_ref):                   # out [BP, HP] f32 (resident carry)
    i = pl.program_id(0)

    @pl.when(i == 0)
    def _init():
        h_ref[...] = h0_ref[...]
        c_ref[...] = c0_ref[...]

    BP, HP = h_ref.shape
    K = hseq_ref.shape[0] // BP
    wdt = whh_ref.dtype
    whh = whh_ref[...]                            # hoisted: loaded once per block
    h = h_ref[...]
    c = c_ref[...]
    for k in range(K):                            # static unroll of K time steps
        gates = (gx_ref[k * BP:(k + 1) * BP, :]
                 + jnp.dot(h.astype(wdt), whh,
                           preferred_element_type=jnp.float32))   # [BP, 4HP]
        # PyTorch LSTMCell gate order: i, f, g, o (each in its own HP lane slab).
        i_g = jax.nn.sigmoid(gates[:, 0 * HP:1 * HP])
        f_g = jax.nn.sigmoid(gates[:, 1 * HP:2 * HP])
        g_g = jnp.tanh(gates[:, 2 * HP:3 * HP])
        o_g = jax.nn.sigmoid(gates[:, 3 * HP:4 * HP])
        c = f_g * c + i_g * g_g
        h = o_g * jnp.tanh(c)
        hseq_ref[k * BP:(k + 1) * BP, :] = h
    h_ref[...] = h
    c_ref[...] = c


# ---------------------------------------------------------------------------
# Stage 3: batched output projection + online log-softmax normaliser
# ---------------------------------------------------------------------------
def _proj_kernel(h_ref,                           # [R, HP] f32
                 wout_ref,                        # [HP, VT] bf16 (vocab tile)
                 bout_ref,                        # [1, VT] f32 (pad = -1e30)
                 logits_ref,                      # out [R, VT] f32
                 lse_ref,                         # out [R, 1] f32 (resident over j)
                 m_sc, l_sc):                     # VMEM scratch [R, 1] f32
    j = pl.program_id(1)

    @pl.when(j == 0)
    def _init():
        m_sc[...] = jnp.full(m_sc.shape, -jnp.inf, m_sc.dtype)
        l_sc[...] = jnp.zeros(l_sc.shape, l_sc.dtype)

    wdt = wout_ref.dtype
    logits = (jnp.dot(h_ref[...].astype(wdt), wout_ref[...],
                      preferred_element_type=jnp.float32)
              + bout_ref[...])                    # padded vocab lanes -> -1e30
    logits_ref[...] = logits

    m_prev = m_sc[...]
    m_new = jnp.maximum(m_prev, jnp.max(logits, axis=-1, keepdims=True))
    l_sc[...] = (l_sc[...] * jnp.exp(m_prev - m_new)
                 + jnp.sum(jnp.exp(logits - m_new), axis=-1, keepdims=True))
    m_sc[...] = m_new

    @pl.when(j == pl.num_programs(1) - 1)
    def _finalize():
        lse_ref[...] = m_sc[...] + jnp.log(l_sc[...])


# ---------------------------------------------------------------------------
# Stage 4: log_prob = logits - lse  (lane-dense elementwise)
# ---------------------------------------------------------------------------
def _norm_kernel(logits_ref, lse_ref, logp_ref):
    logp_ref[...] = logits_ref[...] - lse_ref[...]


# ---------------------------------------------------------------------------
# Init-time parameter packing (gate-aligned, lane-padded, bf16 weights).
# ---------------------------------------------------------------------------
def pack_generator_params(emb_table, W_ih, W_hh, b_ih, b_hh, W_out, b_out,
                          weight_dtype=jnp.bfloat16):
    V, E = emb_table.shape
    H = W_hh.shape[1]
    HP = _round_up(H, 128)
    VP = _round_up(V, 128)
    EP = _round_up(E, 128)

    # Embedding table stays f32: single-row dynamic gathers are simplest on an
    # unpacked sublane layout; it is cast to bf16 at the matmul inside stage 1.
    emb_p = jnp.zeros((VP, EP), jnp.float32).at[:V, :E].set(
        emb_table.astype(jnp.float32))

    def pack_gates(W, in_dim, in_pad):            # W: [4H, in_dim] -> [in_pad, 4*HP]
        Wt = W.T.astype(jnp.float32)              # [in_dim, 4H]
        out = jnp.zeros((in_pad, 4 * HP), jnp.float32)
        for g in range(4):                        # PyTorch gate order: i, f, g, o
            out = out.at[:in_dim, g * HP:g * HP + H].set(Wt[:, g * H:(g + 1) * H])
        return out.astype(weight_dtype)

    wih_p = pack_gates(W_ih, E, EP)
    whh_p = pack_gates(W_hh, H, HP)

    b_sum = (b_ih + b_hh).astype(jnp.float32)     # biases pre-summed, kept f32
    b_p = jnp.zeros((1, 4 * HP), jnp.float32)
    for g in range(4):
        b_p = b_p.at[0, g * HP:g * HP + H].set(b_sum[g * H:(g + 1) * H])

    wout_p = jnp.zeros((HP, VP), jnp.float32).at[:H, :V].set(
        W_out.T.astype(jnp.float32)).astype(weight_dtype)
    bout_p = jnp.full((1, VP), -1e30, jnp.float32).at[0, :V].set(
        b_out.astype(jnp.float32))

    dims = (V, E, H, VP, EP, HP)
    return (emb_p, wih_p, whh_p, b_p, wout_p, bout_p), dims


# ---------------------------------------------------------------------------
# Wrappers.
# ---------------------------------------------------------------------------
def generator_forward_seq(x_seq, h, c, packed):
    """Fused T-step teacher-forcing rollout.

    x_seq: int32 [T, B]; h, c: float32 [B, H].
    Returns (log_prob [T, B, V], h_T [B, H], c_T [B, H]).
    """
    (emb_p, wih_p, whh_p, b_p, wout_p, bout_p), dims = packed
    V, E, H, VP, EP, HP = dims
    T, B = x_seq.shape
    BP = _round_up(B, 8)
    TBp = T * BP

    # K time steps per grid iteration (rows per block R = K*BP, capped at 128).
    K = _largest_divisor(T, max(1, 128 // BP))
    R = K * BP
    n_rt = T // K
    VT = _pick_vocab_tile(VP)
    n_v = VP // VT

    vmem = pl.BlockSpec(memory_space=pltpu.MemorySpace.VMEM)   # single-buffered resident

    # 1-D token ids (2-D SMEM arrays pad to [8,128] words).
    x_p = jnp.zeros((T, BP), jnp.int32).at[:, :B].set(
        x_seq.astype(jnp.int32)).reshape(TBp)
    h_p = jnp.zeros((BP, HP), jnp.float32).at[:B, :H].set(h.astype(jnp.float32))
    c_p = jnp.zeros((BP, HP), jnp.float32).at[:B, :H].set(c.astype(jnp.float32))

    # ---- Stage 1: gather + batched x @ W_ih + bias over all T*B rows.
    gx = pl.pallas_call(
        _embed_gates_kernel,
        out_shape=jax.ShapeDtypeStruct((TBp, 4 * HP), jnp.float32),
        grid_spec=pltpu.PrefetchScalarGridSpec(
            num_scalar_prefetch=1,
            grid=(n_rt,),
            in_specs=[vmem, vmem, vmem],                        # emb, W_ih, bias
            out_specs=pl.BlockSpec((R, 4 * HP), lambda i, tok: (i, 0)),
            scratch_shapes=[pltpu.VMEM((R, EP), jnp.float32)],
        ),
        compiler_params=pltpu.CompilerParams(
            dimension_semantics=("parallel",)),
    )(x_p, emb_p, wih_p, b_p)

    # ---- Stage 2: sequential LSTM recurrence (h/c carried in output refs).
    hseq, h_fin, c_fin = pl.pallas_call(
        _lstm_kernel,
        out_shape=(jax.ShapeDtypeStruct((TBp, HP), jnp.float32),
                   jax.ShapeDtypeStruct((BP, HP), jnp.float32),
                   jax.ShapeDtypeStruct((BP, HP), jnp.float32)),
        grid_spec=pltpu.PrefetchScalarGridSpec(
            num_scalar_prefetch=0,
            grid=(n_rt,),
            in_specs=[pl.BlockSpec((R, 4 * HP), lambda i: (i, 0)),  # gates_x block
                      vmem, vmem, vmem],                            # h0, c0, W_hh
            out_specs=[pl.BlockSpec((R, HP), lambda i: (i, 0)),     # h per step
                       pl.BlockSpec((BP, HP), lambda i: (0, 0)),    # h carry/final
                       pl.BlockSpec((BP, HP), lambda i: (0, 0))],   # c carry/final
        ),
        compiler_params=pltpu.CompilerParams(
            dimension_semantics=("arbitrary",)),
    )(gx, h_p, c_p, whh_p)

    # ---- Stage 3: batched projection + online log-softmax (V tiled).
    logits, lse = pl.pallas_call(
        _proj_kernel,
        out_shape=(jax.ShapeDtypeStruct((TBp, VP), jnp.float32),
                   jax.ShapeDtypeStruct((TBp, 1), jnp.float32)),
        grid_spec=pltpu.PrefetchScalarGridSpec(
            num_scalar_prefetch=0,
            grid=(n_rt, n_v),
            in_specs=[pl.BlockSpec((R, HP), lambda i, j: (i, 0)),
                      pl.BlockSpec((HP, VT), lambda i, j: (0, j)),
                      pl.BlockSpec((1, VT), lambda i, j: (0, j))],
            out_specs=[pl.BlockSpec((R, VT), lambda i, j: (i, j)),
                       pl.BlockSpec((R, 1), lambda i, j: (i, 0))],
            scratch_shapes=[pltpu.VMEM((R, 1), jnp.float32),
                            pltpu.VMEM((R, 1), jnp.float32)],
        ),
        compiler_params=pltpu.CompilerParams(
            dimension_semantics=("parallel", "arbitrary")),
    )(hseq, wout_p, bout_p)

    # ---- Stage 4: log_prob = logits - lse (lane-dense stores).
    logp_flat = pl.pallas_call(
        _norm_kernel,
        out_shape=jax.ShapeDtypeStruct((TBp, VP), jnp.float32),
        grid_spec=pltpu.PrefetchScalarGridSpec(
            num_scalar_prefetch=0,
            grid=(n_rt, n_v),
            in_specs=[pl.BlockSpec((R, VT), lambda i, j: (i, j)),
                      pl.BlockSpec((R, 1), lambda i, j: (i, 0))],
            out_specs=pl.BlockSpec((R, VT), lambda i, j: (i, j)),
        ),
        compiler_params=pltpu.CompilerParams(
            dimension_semantics=("parallel", "arbitrary")),
    )(logits, lse)

    logp = logp_flat.reshape(T, BP, VP)[:, :B, :V]
    return logp, h_fin[:B, :H], c_fin[:B, :H]


def generator_forward(x_tokens, h, c, packed):
    """One Generator.forward step (T=1 special case of the fused pipeline)."""
    logp, h_new, c_new = generator_forward_seq(x_tokens[None, :], h, c, packed)
    return logp[0], h_new, c_new


# ---------------------------------------------------------------------------
# Pure-JAX (f32) reference mirroring the PyTorch semantics.
# ---------------------------------------------------------------------------
def _reference_forward(x_tokens, h, c, params):
    emb_table, W_ih, W_hh, b_ih, b_hh, W_out, b_out = params
    emb_x = jnp.take(emb_table, x_tokens, axis=0)
    gates = emb_x @ W_ih.T + b_ih + h @ W_hh.T + b_hh
    H = h.shape[1]
    i_g = jax.nn.sigmoid(gates[:, 0 * H:1 * H])
    f_g = jax.nn.sigmoid(gates[:, 1 * H:2 * H])
    g_g = jnp.tanh(gates[:, 2 * H:3 * H])
    o_g = jax.nn.sigmoid(gates[:, 3 * H:4 * H])
    c_new = f_g * c + i_g * g_g
    h_new = o_g * jnp.tanh(c_new)
    logits = h_new @ W_out.T + b_out
    return jax.nn.log_softmax(logits, axis=-1), h_new, c_new


def _reference_forward_seq(x_seq, h, c, params):
    lps = []
    for t in range(x_seq.shape[0]):
        lp, h, c = _reference_forward(x_seq[t], h, c, params)
        lps.append(lp)
    return jnp.stack(lps, axis=0), h, c


if __name__ == "__main__":
    # Small config consistent with Generator(num_emb=V, emb_dim=E, hidden_dim=H,
    # sequence_length=T, batch_size=B).  V=300 -> VP=384 -> 3 vocab tiles, so
    # the online log-softmax path is actually exercised.
    B, V, E, H, T = 8, 300, 16, 32, 8

    key = jax.random.PRNGKey(0)
    ks = jax.random.split(key, 8)
    # nn.init.normal(p, 0, 0.1) on every parameter.
    emb_table = 0.1 * jax.random.normal(ks[0], (V, E), jnp.float32)
    W_ih = 0.1 * jax.random.normal(ks[1], (4 * H, E), jnp.float32)
    W_hh = 0.1 * jax.random.normal(ks[2], (4 * H, H), jnp.float32)
    b_ih = 0.1 * jax.random.normal(ks[3], (4 * H,), jnp.float32)
    b_hh = 0.1 * jax.random.normal(ks[4], (4 * H,), jnp.float32)
    W_out = 0.1 * jax.random.normal(ks[5], (V, H), jnp.float32)
    b_out = 0.1 * jax.random.normal(ks[6], (V,), jnp.float32)
    raw_params = (emb_table, W_ih, W_hh, b_ih, b_hh, W_out, b_out)

    # Init-time packing (gate-aligned, lane-padded, bf16 weights, summed biases).
    packed = pack_generator_params(*raw_params)

    x_seq = jax.random.randint(ks[7], (T, B), 0, V, dtype=jnp.int32)
    h0 = jnp.zeros((B, H), jnp.float32)
    c0 = jnp.zeros((B, H), jnp.float32)

    # Tolerance is loose enough for the bf16 weight/activation cast on the MXU
    # (estimated error a few 1e-4 at these scales), tight enough to catch bugs.
    TOL = 3e-3

    # Single-step forward (matches Generator.forward).
    lp1, h1, c1 = generator_forward(x_seq[0], h0, c0, packed)
    jax.block_until_ready((lp1, h1, c1))
    ref_lp1, ref_h1, ref_c1 = _reference_forward(x_seq[0], h0, c0, raw_params)
    assert jnp.allclose(lp1, ref_lp1, atol=TOL), "single-step log_prob mismatch"
    assert jnp.allclose(h1, ref_h1, atol=TOL), "single-step h mismatch"
    assert jnp.allclose(c1, ref_c1, atol=TOL), "single-step c mismatch"

    # Fused T-step rollout (teacher-forcing loop).
    lps, hT, cT = generator_forward_seq(x_seq, h0, c0, packed)
    jax.block_until_ready((lps, hT, cT))
    ref_lps, ref_hT, ref_cT = _reference_forward_seq(x_seq, h0, c0, raw_params)
    assert jnp.allclose(lps, ref_lps, atol=TOL), "sequence log_prob mismatch"
    assert jnp.allclose(hT, ref_hT, atol=TOL), "sequence h mismatch"
    assert jnp.allclose(cT, ref_cT, atol=TOL), "sequence c mismatch"

    print("KERNEL_OK")
</pallas_src>

<mosaic_0001>
module attributes {stable_mosaic.version = 11 : i64} {
  func.func @_embed_gates_kernel(%arg0: i32, %arg1: memref<8xi32, #tpu.memory_space<smem>>, %arg2: memref<384x128xf32, #tpu.memory_space<vmem>>, %arg3: memref<128x512xbf16, #tpu.memory_space<vmem>>, %arg4: memref<1x512xf32, #tpu.memory_space<vmem>>, %arg5: memref<8x512xf32, #tpu.memory_space<vmem>>, %arg6: memref<8x128xf32, #tpu.memory_space<vmem>>) attributes {dimension_semantics = [#tpu.dimension_semantics<parallel>], iteration_bounds = array<i64: 1>, scalar_prefetch = 1 : i64, scratch_operands = 1 : i64, tpu.core_type = #tpu.core_type<tc>, window_params = [{pipeline_mode = #tpu.pipeline_mode<synchronous>, transform_indices = @transform_0, window_bounds = array<i64: 384, 128>}, {pipeline_mode = #tpu.pipeline_mode<synchronous>, transform_indices = @transform_1, window_bounds = array<i64: 128, 512>}, {pipeline_mode = #tpu.pipeline_mode<synchronous>, transform_indices = @transform_2, window_bounds = array<i64: 1, 512>}, {transform_indices = @transform_3, window_bounds = array<i64: 8, 512>}]} {
    %c8_i32 = arith.constant 8 : i32
    %0 = arith.muli %arg0, %c8_i32 : i32
    %c0_i32 = arith.constant 0 : i32
    %1 = arith.addi %0, %c0_i32 : i32
    %2 = arith.index_cast %1 : i32 to index
    %3 = memref.load %arg1[%2] : memref<8xi32, #tpu.memory_space<smem>>
    %4 = arith.index_cast %3 : i32 to index
    %c0 = arith.constant 0 : index
    %5 = vector.load %arg2[%4, %c0] : memref<384x128xf32, #tpu.memory_space<vmem>>, vector<1x128xf32>
    %c0_0 = arith.constant 0 : index
    %c0_1 = arith.constant 0 : index
    %6 = vector.load %arg6[%c0_0, %c0_1] : memref<8x128xf32, #tpu.memory_space<vmem>>, vector<1x128xf32>
    tpu.vector_store %arg6[%c0_0, %c0_1], %5 {strides = array<i32>} : memref<8x128xf32, #tpu.memory_space<vmem>>, vector<1x128xf32>,
    %c1_i32 = arith.constant 1 : i32
    %7 = arith.addi %0, %c1_i32 : i32
    %8 = arith.index_cast %7 : i32 to index
    %9 = memref.load %arg1[%8] : memref<8xi32, #tpu.memory_space<smem>>
    %10 = arith.index_cast %9 : i32 to index
    %c0_2 = arith.constant 0 : index
    %11 = vector.load %arg2[%10, %c0_2] : memref<384x128xf32, #tpu.memory_space<vmem>>, vector<1x128xf32>
    %c1 = arith.constant 1 : index
    %c0_3 = arith.constant 0 : index
    %12 = vector.load %arg6[%c1, %c0_3] : memref<8x128xf32, #tpu.memory_space<vmem>>, vector<1x128xf32>
    tpu.vector_store %arg6[%c1, %c0_3], %11 {strides = array<i32>} : memref<8x128xf32, #tpu.memory_space<vmem>>, vector<1x128xf32>,
    %c2_i32 = arith.constant 2 : i32
    %13 = arith.addi %0, %c2_i32 : i32
    %14 = arith.index_cast %13 : i32 to index
    %15 = memref.load %arg1[%14] : memref<8xi32, #tpu.memory_space<smem>>
    %16 = arith.index_cast %15 : i32 to index
    %c0_4 = arith.constant 0 : index
    %17 = vector.load %arg2[%16, %c0_4] : memref<384x128xf32, #tpu.memory_space<vmem>>, vector<1x128xf32>
    %c2 = arith.constant 2 : index
    %c0_5 = arith.constant 0 : index
    %18 = vector.load %arg6[%c2, %c0_5] : memref<8x128xf32, #tpu.memory_space<vmem>>, vector<1x128xf32>
    tpu.vector_store %arg6[%c2, %c0_5], %17 {strides = array<i32>} : memref<8x128xf32, #tpu.memory_space<vmem>>, vector<1x128xf32>,
    %c3_i32 = arith.constant 3 : i32
    %19 = arith.addi %0, %c3_i32 : i32
    %20 = arith.index_cast %19 : i32 to index
    %21 = memref.load %arg1[%20] : memref<8xi32, #tpu.memory_space<smem>>
    %22 = arith.index_cast %21 : i32 to index
    %c0_6 = arith.constant 0 : index
    %23 = vector.load %arg2[%22, %c0_6] : memref<384x128xf32, #tpu.memory_space<vmem>>, vector<1x128xf32>
    %c3 = arith.constant 3 : index
    %c0_7 = arith.constant 0 : index
    %24 = vector.load %arg6[%c3, %c0_7] : memref<8x128xf32, #tpu.memory_space<vmem>>, vector<1x128xf32>
    tpu.vector_store %arg6[%c3, %c0_7], %23 {strides = array<i32>} : memref<8x128xf32, #tpu.memory_space<vmem>>, vector<1x128xf32>,
    %c4_i32 = arith.constant 4 : i32
    %25 = arith.addi %0, %c4_i32 : i32
    %26 = arith.index_cast %25 : i32 to index
    %27 = memref.load %arg1[%26] : memref<8xi32, #tpu.memory_space<smem>>
    %28 = arith.index_cast %27 : i32 to index
    %c0_8 = arith.constant 0 : index
    %29 = vector.load %arg2[%28, %c0_8] : memref<384x128xf32, #tpu.memory_space<vmem>>, vector<1x128xf32>
    %c4 = arith.constant 4 : index
    %c0_9 = arith.constant 0 : index
    %30 = vector.load %arg6[%c4, %c0_9] : memref<8x128xf32, #tpu.memory_space<vmem>>, vector<1x128xf32>
    tpu.vector_store %arg6[%c4, %c0_9], %29 {strides = array<i32>} : memref<8x128xf32, #tpu.memory_space<vmem>>, vector<1x128xf32>,
    %c5_i32 = arith.constant 5 : i32
    %31 = arith.addi %0, %c5_i32 : i32
    %32 = arith.index_cast %31 : i32 to index
    %33 = memref.load %arg1[%32] : memref<8xi32, #tpu.memory_space<smem>>
    %34 = arith.index_cast %33 : i32 to index
    %c0_10 = arith.constant 0 : index
    %35 = vector.load %arg2[%34, %c0_10] : memref<384x128xf32, #tpu.memory_space<vmem>>, vector<1x128xf32>
    %c5 = arith.constant 5 : index
    %c0_11 = arith.constant 0 : index
    %36 = vector.load %arg6[%c5, %c0_11] : memref<8x128xf32, #tpu.memory_space<vmem>>, vector<1x128xf32>
    tpu.vector_store %arg6[%c5, %c0_11], %35 {strides = array<i32>} : memref<8x128xf32, #tpu.memory_space<vmem>>, vector<1x128xf32>,
    %c6_i32 = arith.constant 6 : i32
    %37 = arith.addi %0, %c6_i32 : i32
    %38 = arith.index_cast %37 : i32 to index
    %39 = memref.load %arg1[%38] : memref<8xi32, #tpu.memory_space<smem>>
    %40 = arith.index_cast %39 : i32 to index
    %c0_12 = arith.constant 0 : index
    %41 = vector.load %arg2[%40, %c0_12] : memref<384x128xf32, #tpu.memory_space<vmem>>, vector<1x128xf32>
    %c6 = arith.constant 6 : index
    %c0_13 = arith.constant 0 : index
    %42 = vector.load %arg6[%c6, %c0_13] : memref<8x128xf32, #tpu.memory_space<vmem>>, vector<1x128xf32>
    tpu.vector_store %arg6[%c6, %c0_13], %41 {strides = array<i32>} : memref<8x128xf32, #tpu.memory_space<vmem>>, vector<1x128xf32>,
    %c7_i32 = arith.constant 7 : i32
    %43 = arith.addi %0, %c7_i32 : i32
    %44 = arith.index_cast %43 : i32 to index
    %45 = memref.load %arg1[%44] : memref<8xi32, #tpu.memory_space<smem>>
    %46 = arith.index_cast %45 : i32 to index
    %c0_14 = arith.constant 0 : index
    %47 = vector.load %arg2[%46, %c0_14] : memref<384x128xf32, #tpu.memory_space<vmem>>, vector<1x128xf32>
    %c7 = arith.constant 7 : index
    %c0_15 = arith.constant 0 : index
    %48 = vector.load %arg6[%c7, %c0_15] : memref<8x128xf32, #tpu.memory_space<vmem>>, vector<1x128xf32>
    tpu.vector_store %arg6[%c7, %c0_15], %47 {strides = array<i32>} : memref<8x128xf32, #tpu.memory_space<vmem>>, vector<1x128xf32>,
    %c0_16 = arith.constant 0 : index
    %c0_17 = arith.constant 0 : index
    %49 = vector.load %arg6[%c0_16, %c0_17] : memref<8x128xf32, #tpu.memory_space<vmem>>, vector<8x128xf32>
    %50 = arith.truncf %49 : vector<8x128xf32> to vector<8x128xbf16>
    %c0_18 = arith.constant 0 : index
    %c0_19 = arith.constant 0 : index
    %51 = vector.load %arg3[%c0_18, %c0_19] : memref<128x512xbf16, #tpu.memory_space<vmem>>, vector<128x512xbf16>
    %cst = arith.constant dense<0.000000e+00> : vector<8x512xf32>
    %52 = tpu.matmul %50, %51, %cst {dimension_numbers = #tpu.dot_dimension_numbers<[1], [0], [0], [1], [0, 0, 1, 1], [], []>} : vector<8x128xbf16>, vector<128x512xbf16>, vector<8x512xf32> -> vector<8x512xf32>
    %c0_20 = arith.constant 0 : index
    %c0_21 = arith.constant 0 : index
    %53 = vector.load %arg4[%c0_20, %c0_21] : memref<1x512xf32, #tpu.memory_space<vmem>>, vector<1x512xf32>
    %54 = vector.broadcast %53 : vector<1x512xf32> to vector<8x512xf32>
    %55 = arith.addf %52, %54 : vector<8x512xf32>
    %c0_22 = arith.constant 0 : index
    %c0_23 = arith.constant 0 : index
    %56 = vector.load %arg5[%c0_22, %c0_23] : memref<8x512xf32, #tpu.memory_space<vmem>>, vector<8x512xf32>
    tpu.vector_store %arg5[%c0_22, %c0_23], %55 {strides = array<i32>} : memref<8x512xf32, #tpu.memory_space<vmem>>, vector<8x512xf32>,
    return
  }
  func.func @transform_0(%arg0: i32, %arg1: memref<8xi32, #tpu.memory_space<smem>>) -> (i32, i32) {
    %c0_i32 = arith.constant 0 : i32
    %c0_i32_0 = arith.constant 0 : i32
    %c0_i32_1 = arith.constant 0 : i32
    return %c0_i32, %c0_i32_0 : i32, i32
  }
  func.func @transform_1(%arg0: i32, %arg1: memref<8xi32, #tpu.memory_space<smem>>) -> (i32, i32) {
    %c0_i32 = arith.constant 0 : i32
    %c0_i32_0 = arith.constant 0 : i32
    %c0_i32_1 = arith.constant 0 : i32
    return %c0_i32, %c0_i32_0 : i32, i32
  }
  func.func @transform_2(%arg0: i32, %arg1: memref<8xi32, #tpu.memory_space<smem>>) -> (i32, i32) {
    %c0_i32 = arith.constant 0 : i32
    %c0_i32_0 = arith.constant 0 : i32
    %c0_i32_1 = arith.constant 0 : i32
    return %c0_i32, %c0_i32_0 : i32, i32
  }
  func.func @transform_3(%arg0: i32, %arg1: memref<8xi32, #tpu.memory_space<smem>>) -> (i32, i32) {
    %c0_i32 = arith.constant 0 : i32
    %c0_i32_0 = arith.constant 0 : i32
    return %arg0, %c0_i32 : i32, i32
  }
}

</mosaic_0001>

<llo_original>
// kernel: tpu_custom_call.1
$region0: #{tpu_custom_call.1}
  #allocation0 [shape = 'u32[]', space=smem, size = 0x4, offset = 0x4, fixed_abs, tag = 'smem constant byte address 0x4 - core index']
  #allocation1 [shape = 'u32[144,128]{1,0:T(1,128)}', space=vmem, size = 0x12000, scoped, tag = 'internal scratch']
  #allocation2 [shape = 'f32[8,128]{1,0:T(8,128)}', space=vmem, size = 0x1000, scoped, tag = 'scratch operand']
  #allocation3 [shape = 's32[1]{0}', space=sflag, size = 0x4, scoped, tag = 'scoped memory for tpu_custom_call.1']
  #allocation4 [shape = 'u8[512]{0}', space=smem, size = 0x200, scoped, tag = 'prefetched SMEM operand 0']
  %s0 = inlined_call_operand.hbm [shape: s32[8], index: 0, kind: input, shape index: {}]
  %s1 = inlined_call_operand.hbm [shape: f32[384,128], index: 1, kind: input, shape index: {}]
  %s2 = inlined_call_operand.hbm [shape: bf16[128,512], index: 2, kind: input, shape index: {}]
  %s3 = inlined_call_operand.vmem [shape: f32[1,512], index: 3, kind: input, shape index: {}]
  %s4 = inlined_call_operand.hbm [shape: f32[8,512], index: 4, kind: output, shape index: {}]
  %s5 = sld [smem:[#allocation0]]
  $region30: #{tpu_custom_call.1} parent=0
    _
  %s7 = ssub.s32 1, %s5
  %s8 = scalar_select 0, %s7, %s5
  %10 = dma.hbm_to_smem %s0, 16, [#allocation4], [#allocation3]
  %11 = dma.done [#allocation3], 16
  %12 = sfence
  $region1: #{tpu_custom_call.1} parent=0
    #allocation5 [shape = 'u8[196608]{0}', space=vmem, size = 0x30000, scoped, tag = 'input window, operand 1, single buffered']
    #allocation6 [shape = 's32[1]{0}', space=sflag, size = 0x4, scoped, tag = 'scoped memory for tpu_custom_call.1']
    #allocation7 [shape = 's32[1]{0}', space=sflag, size = 0x4, scoped, tag = 'scoped memory for tpu_custom_call.1']
    #allocation8 [shape = 'u8[131072]{0}', space=vmem, size = 0x20000, scoped, tag = 'input window, operand 2, single buffered']
    #allocation9 [shape = 's32[1]{0}', space=sflag, size = 0x4, scoped, tag = 'scoped memory for tpu_custom_call.1']
    #allocation10 [shape = 'u8[16384]{0}', space=vmem, size = 0x4000, scoped, tag = 'output window, operand 0, single buffered']
    %13 = vsyncpa [#allocation6], 0
    %14 = vsyncpa [#allocation9], 0
    %15 = vsyncpa [#allocation7], 0
    // Predicated region
    $region2: #{tpu_custom_call.1} parent=1 // pred_check
      _
    $region3: #{tpu_custom_call.1} parent=1 // pred_check_branch
      %17 = sbr.rel (0) target = $region5
    $region4: #{tpu_custom_call.1} parent=1 // pred_region
      %s19 = ssub.s32 6144, 6144
      %20 = vsyncadd [#allocation6], %s19
      %s21 = sshll.u32 [#allocation5], 4
      %s22 = int_to_ptr.vmem [resolvable:$true] %s21
      %27 = dma.hbm_to_vmem [thread:$0]  %s1, 6144, %s22, [#allocation6], 128, 128, 8
    $region5: #{tpu_custom_call.1} parent=1 // pred_fallthru
      _
    // Predicated region
    $region6: #{tpu_custom_call.1} parent=1 // pred_check
      _
    $region7: #{tpu_custom_call.1} parent=1 // pred_check_branch
      %29 = sbr.rel (0) target = $region9
    $region8: #{tpu_custom_call.1} parent=1 // pred_region
      %s31 = ssub.s32 4096, 4096
      %32 = vsyncadd [#allocation9], %s31
      %s33 = sshll.u32 [#allocation8], 4
      %s34 = int_to_ptr.vmem [resolvable:$true] %s33
      %39 = dma.hbm_to_vmem [thread:$0]  %s2, 4096, %s34, [#allocation9], 256, 256, 16
    $region9: #{tpu_custom_call.1} parent=1 // pred_fallthru
      _
    // Predicated region
    $region10: #{tpu_custom_call.1} parent=1 // pred_check
      _
    $region11: #{tpu_custom_call.1} parent=1 // pred_check_branch
      %41 = sbr.rel (0) target = $region13
    $region12: #{tpu_custom_call.1} parent=1 // pred_region
      _
    $region13: #{tpu_custom_call.1} parent=1 // pred_fallthru
      _
    // Predicated region
    $region14: #{tpu_custom_call.1} parent=1 // pred_check
      _
    $region15: #{tpu_custom_call.1} parent=1 // pred_check_branch
      %43 = sbr.rel (0) target = $region17
    $region16: #{tpu_custom_call.1} parent=1 // pred_region
      %44 = dma.done [#allocation6], 6144
    $region17: #{tpu_custom_call.1} parent=1 // pred_fallthru
      _
    // Predicated region
    $region18: #{tpu_custom_call.1} parent=1 // pred_check
      _
    $region19: #{tpu_custom_call.1} parent=1 // pred_check_branch
      %46 = sbr.rel (0) target = $region21
    $region20: #{tpu_custom_call.1} parent=1 // pred_region
      %47 = dma.done [#allocation9], 4096
    $region21: #{tpu_custom_call.1} parent=1 // pred_fallthru
      _
    %s49 = smul.u32 0, 8
    %s50 = sld [smem:[#allocation4 + %s49]]
    %s51 = scalar_lea.vmem [#allocation5], %s50
    %v52 = vld [vmem:[%s51] sm:$0x1]
    %53 = vst [vmem:[#allocation2] sm:$0x1] %v52
    %s54 = sadd.s32 %s49, 1
    %s55 = sld [smem:[#allocation4 + %s54]]
    %s56 = scalar_lea.vmem [#allocation5], %s55
    %v57 = vld [vmem:[%s56] sm:$0x1]
    %58 = vst [vmem:[#allocation2 + $0x1] sm:$0x1] %v57
    %s59 = sadd.s32 %s49, 2
    %s60 = sld [smem:[#allocation4 + %s59]]
    %s61 = scalar_lea.vmem [#allocation5], %s60
    %v62 = vld [vmem:[%s61] sm:$0x1]
    %63 = vst [vmem:[#allocation2 + $0x2] sm:$0x1] %v62
    %s64 = sadd.s32 %s49, 3
    %s65 = sld [smem:[#allocation4 + %s64]]
    %s66 = scalar_lea.vmem [#allocation5], %s65
    %v67 = vld [vmem:[%s66] sm:$0x1]
    %68 = vst [vmem:[#allocation2 + $0x3] sm:$0x1] %v67
    %s69 = sadd.s32 %s49, 4
    %s70 = sld [smem:[#allocation4 + %s69]]
    %s71 = scalar_lea.vmem [#allocation5], %s70
    %v72 = vld [vmem:[%s71] sm:$0x1]
    %73 = vst [vmem:[#allocation2 + $0x4] sm:$0x1] %v72
    %s74 = sadd.s32 %s49, 5
    %s75 = sld [smem:[#allocation4 + %s74]]
    %s76 = scalar_lea.vmem [#allocation5], %s75
    %v77 = vld [vmem:[%s76] sm:$0x1]
    %78 = vst [vmem:[#allocation2 + $0x5] sm:$0x1] %v77
    %s79 = sadd.s32 %s49, 6
    %s80 = sld [smem:[#allocation4 + %s79]]
    %s81 = scalar_lea.vmem [#allocation5], %s80
    %v82 = vld [vmem:[%s81] sm:$0x1]
    %83 = vst [vmem:[#allocation2 + $0x6] sm:$0x1] %v82
    %s84 = sadd.s32 %s49, 7
    %s85 = sld [smem:[#allocation4 + %s84]]
    %s86 = scalar_lea.vmem [#allocation5], %s85
    %v87 = vld [vmem:[%s86] sm:$0x1]
    %88 = vst [vmem:[#allocation2 + $0x7] sm:$0x1] %v87
    %v89 = vld [vmem:[#allocation2] sm:$0xff]
    %v90 = vpack.c.bf16 %v89, %v89
    %v91 = vld [vmem:[#allocation8] sm:$0xff]
    %v92 = vld [vmem:[#allocation8 + $0x8] sm:$0xff]
    %v93 = vld [vmem:[#allocation8 + $0x10] sm:$0xff]
    %v94 = vld [vmem:[#allocation8 + $0x18] sm:$0xff]
    %v95 = vld [vmem:[#allocation8 + $0x20] sm:$0xff]
    %v96 = vld [vmem:[#allocation8 + $0x28] sm:$0xff]
    %v97 = vld [vmem:[#allocation8 + $0x30] sm:$0xff]
    %v98 = vld [vmem:[#allocation8 + $0x38] sm:$0xff]
    %v99 = vld [vmem:[#allocation8 + $0x40] sm:$0xff]
    %v100 = vld [vmem:[#allocation8 + $0x48] sm:$0xff]
    %v101 = vld [vmem:[#allocation8 + $0x50] sm:$0xff]
    %v102 = vld [vmem:[#allocation8 + $0x58] sm:$0xff]
    %v103 = vld [vmem:[#allocation8 + $0x60] sm:$0xff]
    %v104 = vld [vmem:[#allocation8 + $0x68] sm:$0xff]
    %v105 = vld [vmem:[#allocation8 + $0x70] sm:$0xff]
    %v106 = vld [vmem:[#allocation8 + $0x78] sm:$0xff]
    %v107 = vld [vmem:[#allocation8 + $0x80] sm:$0xff]
    %v108 = vld [vmem:[#allocation8 + $0x88] sm:$0xff]
    %v109 = vld [vmem:[#allocation8 + $0x90] sm:$0xff]
    %v110 = vld [vmem:[#allocation8 + $0x98] sm:$0xff]
    %v111 = vld [vmem:[#allocation8 + $0xa0] sm:$0xff]
    %v112 = vld [vmem:[#allocation8 + $0xa8] sm:$0xff]
    %v113 = vld [vmem:[#allocation8 + $0xb0] sm:$0xff]
    %v114 = vld [vmem:[#allocation8 + $0xb8] sm:$0xff]
    %v115 = vld [vmem:[#allocation8 + $0xc0] sm:$0xff]
    %v116 = vld [vmem:[#allocation8 + $0xc8] sm:$0xff]
    %v117 = vld [vmem:[#allocation8 + $0xd0] sm:$0xff]
    %v118 = vld [vmem:[#allocation8 + $0xd8] sm:$0xff]
    %v119 = vld [vmem:[#allocation8 + $0xe0] sm:$0xff]
    %v120 = vld [vmem:[#allocation8 + $0xe8] sm:$0xff]
    %v121 = vld [vmem:[#allocation8 + $0xf0] sm:$0xff]
    %v122 = vld [vmem:[#allocation8 + $0xf8] sm:$0xff]
    %v123 = vld [vmem:[%s3] sm:$0xf]
    %v125 = vlaneseq
    %v126 = vshrl.u32 %v125, 7
    %v127 = vsub.s32 0, %v126
    %v128 = vrot.slane %v123, %v127
    %v129 = vlaneseq
    %v130 = vshrl.u32 %v129, 7
    %v131 = vsub.s32 1, %v130
    %v132 = vrot.slane %v123, %v131
    %v133 = vlaneseq
    %v134 = vshrl.u32 %v133, 7
    %v135 = vsub.s32 2, %v134
    %v136 = vrot.slane %v123, %v135
    %v137 = vlaneseq
    %v138 = vshrl.u32 %v137, 7
    %v139 = vsub.s32 3, %v138
    %v140 = vrot.slane %v123, %v139
    %v177 = vunpack.c.l.b16 %v91
    %v178 = vunpack.c.h.b16 %v91
    %v179 = vunpack.c.l.b16 %v92
    %v180 = vunpack.c.h.b16 %v92
    %v181 = vunpack.c.l.b16 %v93
    %v182 = vunpack.c.h.b16 %v93
    %v183 = vunpack.c.l.b16 %v94
    %v184 = vunpack.c.h.b16 %v94
    %v185 = vunpack.c.l.b16 %v95
    %v186 = vunpack.c.h.b16 %v95
    %v187 = vunpack.c.l.b16 %v96
    %v188 = vunpack.c.h.b16 %v96
    %v189 = vunpack.c.l.b16 %v97
    %v190 = vunpack.c.h.b16 %v97
    %v191 = vunpack.c.l.b16 %v98
    %v192 = vunpack.c.h.b16 %v98
    %v193 = vunpack.c.l.b16 %v99
    %v194 = vunpack.c.h.b16 %v99
    %v195 = vunpack.c.l.b16 %v100
    %v196 = vunpack.c.h.b16 %v100
    %v197 = vunpack.c.l.b16 %v101
    %v198 = vunpack.c.h.b16 %v101
    %v199 = vunpack.c.l.b16 %v102
    %v200 = vunpack.c.h.b16 %v102
    %v201 = vunpack.c.l.b16 %v103
    %v202 = vunpack.c.h.b16 %v103
    %v203 = vunpack.c.l.b16 %v104
    %v204 = vunpack.c.h.b16 %v104
    %v205 = vunpack.c.l.b16 %v105
    %v206 = vunpack.c.h.b16 %v105
    %v207 = vunpack.c.l.b16 %v106
    %v208 = vunpack.c.h.b16 %v106
    %v209 = vunpack.c.l.b16 %v107
    %v210 = vunpack.c.h.b16 %v107
    %v211 = vunpack.c.l.b16 %v108
    %v212 = vunpack.c.h.b16 %v108
    %v213 = vunpack.c.l.b16 %v109
    %v214 = vunpack.c.h.b16 %v109
    %v215 = vunpack.c.l.b16 %v110
    %v216 = vunpack.c.h.b16 %v110
    %v217 = vunpack.c.l.b16 %v111
    %v218 = vunpack.c.h.b16 %v111
    %v219 = vunpack.c.l.b16 %v112
    %v220 = vunpack.c.h.b16 %v112
    %v221 = vunpack.c.l.b16 %v113
    %v222 = vunpack.c.h.b16 %v113
    %v223 = vunpack.c.l.b16 %v114
    %v224 = vunpack.c.h.b16 %v114
    %v225 = vunpack.c.l.b16 %v115
    %v226 = vunpack.c.h.b16 %v115
    %v227 = vunpack.c.l.b16 %v116
    %v228 = vunpack.c.h.b16 %v116
    %v229 = vunpack.c.l.b16 %v117
    %v230 = vunpack.c.h.b16 %v117
    %v231 = vunpack.c.l.b16 %v118
    %v232 = vunpack.c.h.b16 %v118
    %v233 = vunpack.c.l.b16 %v119
    %v234 = vunpack.c.h.b16 %v119
    %v235 = vunpack.c.l.b16 %v120
    %v236 = vunpack.c.h.b16 %v120
    %v237 = vunpack.c.l.b16 %v121
    %v238 = vunpack.c.h.b16 %v121
    %v239 = vunpack.c.l.b16 %v122
    %v240 = vunpack.c.h.b16 %v122
    %v241 = vpack.c.b16 %v181, %v177
    %v242 = vpack.c.b16 %v182, %v178
    %v243 = vpack.c.b16 %v183, %v179
    %v244 = vpack.c.b16 %v184, %v180
    %v245 = vpack.c.b16 %v189, %v185
    %v246 = vpack.c.b16 %v190, %v186
    %v247 = vpack.c.b16 %v191, %v187
    %v248 = vpack.c.b16 %v192, %v188
    %v249 = vpack.c.b16 %v197, %v193
    %v250 = vpack.c.b16 %v198, %v194
    %v251 = vpack.c.b16 %v199, %v195
    %v252 = vpack.c.b16 %v200, %v196
    %v253 = vpack.c.b16 %v205, %v201
    %v254 = vpack.c.b16 %v206, %v202
    %v255 = vpack.c.b16 %v207, %v203
    %v256 = vpack.c.b16 %v208, %v204
    %v257 = vpack.c.b16 %v213, %v209
    %v258 = vpack.c.b16 %v214, %v210
    %v259 = vpack.c.b16 %v215, %v211
    %v260 = vpack.c.b16 %v216, %v212
    %v261 = vpack.c.b16 %v221, %v217
    %v262 = vpack.c.b16 %v222, %v218
    %v263 = vpack.c.b16 %v223, %v219
    %v264 = vpack.c.b16 %v224, %v220
    %v265 = vpack.c.b16 %v229, %v225
    %v266 = vpack.c.b16 %v230, %v226
    %v267 = vpack.c.b16 %v231, %v227
    %v268 = vpack.c.b16 %v232, %v228
    %v269 = vpack.c.b16 %v237, %v233
    %v270 = vpack.c.b16 %v238, %v234
    %v271 = vpack.c.b16 %v239, %v235
    %v272 = vpack.c.b16 %v240, %v236
    %305 = vmatprep.subr.bf16.mxu0 %v270
    %306 = vmatpush1.bf16.msra.mxu0 %v269
    %307 = vmatprep.subr.bf16.mxu0 %v266
    %308 = vmatpush1.bf16.msra.mxu0 %v265
    %309 = vmatprep.subr.bf16.mxu0 %v262
    %310 = vmatpush1.bf16.msra.mxu0 %v261
    %311 = vmatprep.subr.bf16.mxu0 %v258
    %312 = vmatpush1.bf16.msra.mxu0 %v257
    %313 = vmatprep.subr.bf16.mxu0 %v254
    %314 = vmatpush1.bf16.msra.mxu0 %v253
    %315 = vmatprep.subr.bf16.mxu0 %v250
    %316 = vmatpush1.bf16.msra.mxu0 %v249
    %317 = vmatprep.subr.bf16.mxu0 %v246
    %318 = vmatpush1.bf16.msra.mxu0 %v245
    %319 = vmatprep.subr.bf16.mxu0 %v242
    %320 = vmatpush1.bf16.msra.mxu0 %v241
    %321 = vmatprep.subr.bf16.mxu0 0
    %322 = vmatpush2.bf16.msra.mxu0 0
    %323 = vmatprep.subr.bf16.mxu0 0
    %324 = vmatpush2.bf16.msra.mxu0 0
    %325 = vmatprep.subr.bf16.mxu0 0
    %326 = vmatpush2.bf16.msra.mxu0 0
    %327 = vmatprep.subr.bf16.mxu0 0
    %328 = vmatpush2.bf16.msra.mxu0 0
    %329 = vmatprep.subr.bf16.mxu0 0
    %330 = vmatpush2.bf16.msra.mxu0 0
    %331 = vmatprep.subr.bf16.mxu0 0
    %332 = vmatpush2.bf16.msra.mxu0 0
    %333 = vmatprep.subr.bf16.mxu0 0
    %334 = vmatpush2.bf16.msra.mxu0 0
    %335 = vmatprep.subr.bf16.mxu0 0
    %336 = vmatpush2.bf16.msra.mxu0 0
    %337 = vmatprep.mubr.bf16.mxu0 0
    %338 = vmatmul.mubr.bf16.gmra.mxu0 %v90
    %v339 = vpop.f32.mrf.mxu0
    %v340 = vadd.f32 %v128, %v339
    %v341 = vpop.f32.mrf.mxu0
    %v342 = vadd.f32 %v132, %v341
    %v343 = vpop.f32.mrf.mxu0
    %v344 = vpop.f32.mrf.mxu0
    %345 = vdwg.mxu0
    %346 = vmatprep.subr.bf16.mxu0 %v272
    %347 = vmatpush1.bf16.msra.mxu0 %v271
    %348 = vmatprep.subr.bf16.mxu0 %v268
    %349 = vmatpush1.bf16.msra.mxu0 %v267
    %350 = vmatprep.subr.bf16.mxu0 %v264
    %351 = vmatpush1.bf16.msra.mxu0 %v263
    %352 = vmatprep.subr.bf16.mxu0 %v260
    %353 = vmatpush1.bf16.msra.mxu0 %v259
    %354 = vmatprep.subr.bf16.mxu0 %v256
    %355 = vmatpush1.bf16.msra.mxu0 %v255
    %356 = vmatprep.subr.bf16.mxu0 %v252
    %357 = vmatpush1.bf16.msra.mxu0 %v251
    %358 = vmatprep.subr.bf16.mxu0 %v248
    %359 = vmatpush1.bf16.msra.mxu0 %v247
    %360 = vmatprep.subr.bf16.mxu0 %v244
    %361 = vmatpush1.bf16.msra.mxu0 %v243
    %362 = vmatprep.subr.bf16.mxu0 0
    %363 = vmatpush2.bf16.msra.mxu0 0
    %364 = vmatprep.subr.bf16.mxu0 0
    %365 = vmatpush2.bf16.msra.mxu0 0
    %366 = vmatprep.subr.bf16.mxu0 0
    %367 = vmatpush2.bf16.msra.mxu0 0
    %368 = vmatprep.subr.bf16.mxu0 0
    %369 = vmatpush2.bf16.msra.mxu0 0
    %370 = vmatprep.subr.bf16.mxu0 0
    %371 = vmatpush2.bf16.msra.mxu0 0
    %372 = vmatprep.subr.bf16.mxu0 0
    %373 = vmatpush2.bf16.msra.mxu0 0
    %374 = vmatprep.subr.bf16.mxu0 0
    %375 = vmatpush2.bf16.msra.mxu0 0
    %376 = vmatprep.subr.bf16.mxu0 0
    %377 = vmatpush2.bf16.msra.mxu0 0
    %378 = vmatprep.mubr.bf16.mxu0 0
    %379 = vmatmul.mubr.bf16.gmra.mxu0 %v90
    %v380 = vpop.f32.mrf.mxu0
    %v381 = vadd.f32 %v136, %v380
    %v382 = vpop.f32.mrf.mxu0
    %v383 = vadd.f32 %v140, %v382
    %v384 = vpop.f32.mrf.mxu0
    %v385 = vpop.f32.mrf.mxu0
    %386 = vdwg.mxu0
    %387 = vst [vmem:[#allocation10] sm:$0xff] %v340
    %388 = vst [vmem:[#allocation10 + $0x8] sm:$0xff] %v342
    %389 = vst [vmem:[#allocation10 + $0x10] sm:$0xff] %v381
    %390 = vst [vmem:[#allocation10 + $0x18] sm:$0xff] %v383
    // Predicated region
    $region22: #{tpu_custom_call.1} parent=1 // pred_check
      _
    $region23: #{tpu_custom_call.1} parent=1 // pred_check_branch
      %392 = sbr.rel (0) target = $region25
    $region24: #{tpu_custom_call.1} parent=1 // pred_region
      %s394 = ssub.s32 512, 512
      %395 = vsyncadd [#allocation7], %s394
      %s397 = sshll.u32 [#allocation10], 4
      %s398 = int_to_ptr.vmem [resolvable:$true] %s397
      %400 = dma.vmem_to_hbm [thread:$0]  %s398, 512, %s4, [#allocation7]
    $region25: #{tpu_custom_call.1} parent=1 // pred_fallthru
      _
    // Predicated region
    $region26: #{tpu_custom_call.1} parent=1 // pred_check
      _
    $region27: #{tpu_custom_call.1} parent=1 // pred_check_branch
      %402 = sbr.rel (0) target = $region29
    $region28: #{tpu_custom_call.1} parent=1 // pred_region
      %403 = dma.done [#allocation7], 512
    $region29: #{tpu_custom_call.1} parent=1 // pred_fallthru
      _
    %404 = vsyncpa [#allocation6], 1
    %405 = vsyncpa [#allocation9], 1
    %406 = vsyncpa [#allocation7], 1

</llo_original>
